<compile_context>
chip_gen: v6e
topology: v6e:2x2x1
jax: 0.10.0
libtpu: 0.0.40
codegen_flags: <defaults>
</compile_context>

<pallas_src>
import functools

import jax
import jax.numpy as jnp
from jax.experimental import pallas as pl
from jax.experimental.pallas import tpu as pltpu


def net_kernel(x_ref, w1c_ref, b1p_ref, w2p_ref, b2p_ref, o_ref, *, n_hidden):
    """One batch tile of the fused Net forward.

    x_ref   : (TB, D_in)                      streamed input rows
    w1c_ref : (D_in, H + D_ctl)               [layer1.W^T | control.W^T]
    b1p_ref : (1, H + D_ctl)                  [b1 | 0]
    w2p_ref : (H + D_ctl, D_out + D_ctl)      [[W2^T, 0], [0, I]]
    b2p_ref : (1, D_out + D_ctl)              [b2 | 0]
    o_ref   : (TB, D_out + D_ctl)             lane-dense output slab [out | u]
    """
    x = x_ref[...]                        # (TB, D_in) f32
    w1c = w1c_ref[...]                    # (D_in, H + D_ctl)

    # K = D_in = 2 contraction on the VPU: unrolled broadcast multiply-adds
    # (one outer product per input feature) instead of a depth-2 MXU matmul.
    d_in = x.shape[1]
    acc = x[:, 0:1] * w1c[0:1, :]
    for d in range(1, d_in):
        acc = acc + x[:, d:d + 1] * w1c[d:d + 1, :]      # (TB, H + D_ctl)

    # tanh + bias on the hidden lanes, pass-through (u = x @ Wc^T) on the
    # control lanes.  tanh runs on the whole vreg (EUP) and is masked out on
    # the control lanes by the select — no extra cost, no concatenation.
    col = jax.lax.broadcasted_iota(jnp.int32, acc.shape, 1)
    z = jnp.where(col < n_hidden, jnp.tanh(acc + b1p_ref[...]), acc)

    # Single MXU contraction producing the combined [out | u] slab:
    #   out columns:  h @ W2^T + b2     (u lanes hit zero rows of w2p)
    #   u   columns:  u @ I             (h lanes hit zero rows of w2p)
    o = jnp.dot(z, w2p_ref[...], preferred_element_type=jnp.float32)
    o_ref[...] = (o + b2p_ref[...]).astype(o_ref.dtype)


def net_forward(x, w1, b1, w2, b2, wc, *, block_b=256):
    """x: (B, D_in); w1/w2/wc: (in, out) pre-transposed; b1/b2: (out,)."""
    B, D_in = x.shape
    H = w1.shape[1]
    D_out = w2.shape[1]
    D_ctl = wc.shape[1]

    # --- fold the model parameters into the fused slabs (done once, in JAX) ---
    w1c = jnp.concatenate([w1, wc], axis=1)                       # (D_in, H+D_ctl)
    b1p = jnp.concatenate([b1, jnp.zeros((D_ctl,), b1.dtype)]).reshape(1, H + D_ctl)
    w2p = jnp.zeros((H + D_ctl, D_out + D_ctl), jnp.float32)
    w2p = w2p.at[:H, :D_out].set(w2)
    w2p = w2p.at[H:, D_out:].set(jnp.eye(D_ctl, dtype=jnp.float32))
    b2p = jnp.concatenate([b2, jnp.zeros((D_ctl,), b2.dtype)]).reshape(1, D_out + D_ctl)

    # --- batch tiling: pad B to a multiple of the tile so every block is full ---
    tb = min(block_b, B)
    n_blk = -(-B // tb)                      # cdiv
    Bp = n_blk * tb
    if Bp != B:
        x = jnp.pad(x, ((0, Bp - B), (0, 0)))

    kernel = functools.partial(net_kernel, n_hidden=H)

    out_slab = pl.pallas_call(
        kernel,
        grid=(n_blk,),
        in_specs=[
            # x tiles stream over the batch grid.
            pl.BlockSpec((tb, D_in), lambda i: (i, 0)),
            # Weights/biases: constant index_map -> stay VMEM-resident.
            pl.BlockSpec((D_in, H + D_ctl), lambda i: (0, 0)),
            pl.BlockSpec((1, H + D_ctl), lambda i: (0, 0)),
            pl.BlockSpec((H + D_ctl, D_out + D_ctl), lambda i: (0, 0)),
            pl.BlockSpec((1, D_out + D_ctl), lambda i: (0, 0)),
        ],
        out_specs=pl.BlockSpec((tb, D_out + D_ctl), lambda i: (i, 0)),
        out_shape=jax.ShapeDtypeStruct((Bp, D_out + D_ctl), jnp.float32),
        compiler_params=pltpu.CompilerParams(
            dimension_semantics=("parallel",)),
    )(x, w1c, b1p, w2p, b2p)

    out = out_slab[:B, :D_out]
    u = out_slab[:B, D_out:]
    return out, u


def init_linear(key, fan_in, fan_out, bias=True):
    """Deterministic init mimicking torch.nn.Linear default U(-1/sqrt(fan_in), 1/sqrt(fan_in))."""
    kw, kb = jax.random.split(key)
    bound = 1.0 / jnp.sqrt(fan_in)
    # stored as (in, out) so the kernel computes x @ W
    w = jax.random.uniform(kw, (fan_in, fan_out), jnp.float32, -bound, bound)
    if bias:
        b = jax.random.uniform(kb, (fan_out,), jnp.float32, -bound, bound)
        return w, b
    return w, None


def reference_forward(x, w1, b1, w2, b2, wc):
    h = jnp.tanh(x @ w1 + b1)
    out = h @ w2 + b2
    u = x @ wc
    return out, u


if __name__ == "__main__":
    # Shapes consistent with the module: N = 500 samples, D_in = 2,
    # hidden = 32, n_output = 2, control output = 2.
    B, D_in, H, D_out = 500, 2, 32, 2

    key = jax.random.PRNGKey(0)
    kx, k1, k2, k3 = jax.random.split(key, 4)

    x = jax.random.uniform(kx, (B, D_in), jnp.float32, -6.0, 6.0)
    w1, b1 = init_linear(k1, D_in, H, bias=True)     # layer1
    w2, b2 = init_linear(k2, H, D_out, bias=True)    # layer2
    wc, _ = init_linear(k3, D_in, 2, bias=False)     # control (no bias)

    out, u = net_forward(x, w1, b1, w2, b2, wc)
    out = jax.block_until_ready(out)
    u = jax.block_until_ready(u)

    ref_out, ref_u = reference_forward(x, w1, b1, w2, b2, wc)
    assert out.shape == ref_out.shape and u.shape == ref_u.shape
    assert jnp.allclose(out, ref_out, atol=1e-5, rtol=1e-5), "out mismatch"
    assert jnp.allclose(u, ref_u, atol=1e-5, rtol=1e-5), "u mismatch"

    print("KERNEL_OK")
</pallas_src>

<mosaic_0001>
module attributes {stable_mosaic.version = 11 : i64} {
  func.func @net_kernel(%arg0: i32, %arg1: memref<256x2xf32, #tpu.memory_space<vmem>>, %arg2: memref<2x34xf32, #tpu.memory_space<vmem>>, %arg3: memref<1x34xf32, #tpu.memory_space<vmem>>, %arg4: memref<34x4xf32, #tpu.memory_space<vmem>>, %arg5: memref<1x4xf32, #tpu.memory_space<vmem>>, %arg6: memref<256x4xf32, #tpu.memory_space<vmem>>) attributes {dimension_semantics = [#tpu.dimension_semantics<parallel>], iteration_bounds = array<i64: 2>, scalar_prefetch = 0 : i64, scratch_operands = 0 : i64, tpu.core_type = #tpu.core_type<tc>, window_params = [{transform_indices = @transform_0, window_bounds = array<i64: 256, 2>}, {pipeline_mode = #tpu.pipeline_mode<synchronous>, transform_indices = @transform_1, window_bounds = array<i64: 2, 34>}, {pipeline_mode = #tpu.pipeline_mode<synchronous>, transform_indices = @transform_2, window_bounds = array<i64: 1, 34>}, {pipeline_mode = #tpu.pipeline_mode<synchronous>, transform_indices = @transform_3, window_bounds = array<i64: 34, 4>}, {pipeline_mode = #tpu.pipeline_mode<synchronous>, transform_indices = @transform_4, window_bounds = array<i64: 1, 4>}, {transform_indices = @transform_5, window_bounds = array<i64: 256, 4>}]} {
    %c0 = arith.constant 0 : index
    %c0_0 = arith.constant 0 : index
    %0 = vector.load %arg1[%c0, %c0_0] : memref<256x2xf32, #tpu.memory_space<vmem>>, vector<256x2xf32>
    %c0_1 = arith.constant 0 : index
    %c0_2 = arith.constant 0 : index
    %1 = vector.load %arg2[%c0_1, %c0_2] : memref<2x34xf32, #tpu.memory_space<vmem>>, vector<2x34xf32>
    %2 = vector.extract_strided_slice %0 {offsets = [0, 0], sizes = [256, 1], strides = [1, 1]} : vector<256x2xf32> to vector<256x1xf32>
    %3 = vector.extract_strided_slice %1 {offsets = [0, 0], sizes = [1, 34], strides = [1, 1]} : vector<2x34xf32> to vector<1x34xf32>
    %4 = vector.broadcast %2 : vector<256x1xf32> to vector<256x34xf32>
    %5 = vector.broadcast %3 : vector<1x34xf32> to vector<256x34xf32>
    %6 = arith.mulf %4, %5 : vector<256x34xf32>
    %7 = vector.extract_strided_slice %0 {offsets = [0, 1], sizes = [256, 1], strides = [1, 1]} : vector<256x2xf32> to vector<256x1xf32>
    %8 = vector.extract_strided_slice %1 {offsets = [1, 0], sizes = [1, 34], strides = [1, 1]} : vector<2x34xf32> to vector<1x34xf32>
    %9 = vector.broadcast %7 : vector<256x1xf32> to vector<256x34xf32>
    %10 = vector.broadcast %8 : vector<1x34xf32> to vector<256x34xf32>
    %11 = arith.mulf %9, %10 : vector<256x34xf32>
    %12 = arith.addf %6, %11 : vector<256x34xf32>
    %13 = tpu.iota {dimensions = array<i32: 1>} : vector<256x34xi32>
    %c32_i32 = arith.constant 32 : i32
    %14 = vector.broadcast %c32_i32 : i32 to vector<256x34xi32>
    %15 = arith.cmpi slt, %13, %14 : vector<256x34xi32>
    %c0_3 = arith.constant 0 : index
    %c0_4 = arith.constant 0 : index
    %16 = vector.load %arg3[%c0_3, %c0_4] : memref<1x34xf32, #tpu.memory_space<vmem>>, vector<1x34xf32>
    %17 = vector.broadcast %16 : vector<1x34xf32> to vector<256x34xf32>
    %18 = arith.addf %12, %17 : vector<256x34xf32>
    %19 = math.tanh %18 : vector<256x34xf32>
    %20 = arith.select %15, %19, %12 : vector<256x34xi1>, vector<256x34xf32>
    %c0_5 = arith.constant 0 : index
    %c0_6 = arith.constant 0 : index
    %21 = vector.load %arg4[%c0_5, %c0_6] : memref<34x4xf32, #tpu.memory_space<vmem>>, vector<34x4xf32>
    %cst = arith.constant dense<0.000000e+00> : vector<256x4xf32>
    %22 = tpu.matmul %20, %21, %cst {dimension_numbers = #tpu.dot_dimension_numbers<[1], [0], [0], [1], [0, 0, 1, 1], [], []>} : vector<256x34xf32>, vector<34x4xf32>, vector<256x4xf32> -> vector<256x4xf32>
    %c0_7 = arith.constant 0 : index
    %c0_8 = arith.constant 0 : index
    %23 = vector.load %arg5[%c0_7, %c0_8] : memref<1x4xf32, #tpu.memory_space<vmem>>, vector<1x4xf32>
    %24 = vector.broadcast %23 : vector<1x4xf32> to vector<256x4xf32>
    %25 = arith.addf %22, %24 : vector<256x4xf32>
    %c0_9 = arith.constant 0 : index
    %c0_10 = arith.constant 0 : index
    %26 = vector.load %arg6[%c0_9, %c0_10] : memref<256x4xf32, #tpu.memory_space<vmem>>, vector<256x4xf32>
    tpu.vector_store %arg6[%c0_9, %c0_10], %25 {strides = array<i32>} : memref<256x4xf32, #tpu.memory_space<vmem>>, vector<256x4xf32>,
    return
  }
  func.func @transform_0(%arg0: i32) -> (i32, i32) {
    %c0_i32 = arith.constant 0 : i32
    %c0_i32_0 = arith.constant 0 : i32
    return %arg0, %c0_i32 : i32, i32
  }
  func.func @transform_1(%arg0: i32) -> (i32, i32) {
    %c0_i32 = arith.constant 0 : i32
    %c0_i32_0 = arith.constant 0 : i32
    %c0_i32_1 = arith.constant 0 : i32
    return %c0_i32, %c0_i32_0 : i32, i32
  }
  func.func @transform_2(%arg0: i32) -> (i32, i32) {
    %c0_i32 = arith.constant 0 : i32
    %c0_i32_0 = arith.constant 0 : i32
    %c0_i32_1 = arith.constant 0 : i32
    return %c0_i32, %c0_i32_0 : i32, i32
  }
  func.func @transform_3(%arg0: i32) -> (i32, i32) {
    %c0_i32 = arith.constant 0 : i32
    %c0_i32_0 = arith.constant 0 : i32
    %c0_i32_1 = arith.constant 0 : i32
    return %c0_i32, %c0_i32_0 : i32, i32
  }
  func.func @transform_4(%arg0: i32) -> (i32, i32) {
    %c0_i32 = arith.constant 0 : i32
    %c0_i32_0 = arith.constant 0 : i32
    %c0_i32_1 = arith.constant 0 : i32
    return %c0_i32, %c0_i32_0 : i32, i32
  }
  func.func @transform_5(%arg0: i32) -> (i32, i32) {
    %c0_i32 = arith.constant 0 : i32
    %c0_i32_0 = arith.constant 0 : i32
    return %arg0, %c0_i32 : i32, i32
  }
}

</mosaic_0001>

<llo_original>
// kernel: tpu_custom_call.1
$region0: #{tpu_custom_call.1}
  #allocation0 [shape = 'u32[]', space=smem, size = 0x4, offset = 0x4, fixed_abs, tag = 'smem constant byte address 0x4 - core index']
  #allocation1 [shape = 'u32[144,128]{1,0:T(1,128)}', space=vmem, size = 0x12000, scoped, tag = 'internal scratch']
  %s0 = inlined_call_operand.vmem [shape: f32[512,2], index: 0, kind: input, shape index: {}]
  %s1 = inlined_call_operand.vmem [shape: f32[2,34], index: 1, kind: input, shape index: {}]
  %s2 = inlined_call_operand.vmem [shape: f32[1,34], index: 2, kind: input, shape index: {}]
  %s3 = inlined_call_operand.vmem [shape: f32[34,4], index: 3, kind: input, shape index: {}]
  %s4 = inlined_call_operand.vmem [shape: f32[1,4], index: 4, kind: input, shape index: {}]
  %s5 = inlined_call_operand.vmem [shape: f32[512,4], index: 5, kind: output, shape index: {}]
  %s6 = sld [smem:[#allocation0]]
  $region53: #{tpu_custom_call.1} parent=0
    _
  %s8 = ssub.s32 1, %s6
  %s9 = scalar_select 0, %s8, %s6
  loop: start=0, step=1, limit=4
  $region2: #{tpu_custom_call.1} parent=0 // loop_pre_header
    _
  $region3: #{tpu_custom_call.1} parent=0 // loop_header
    %s11 = sphi 0, %s15
    %p12 = scmp.ge.s32.totalorder %s11, 4
    %s21 = sphi 0, %s23
    %s24 = sphi 0, %s21
    %s25 = sphi 0, %s24
    %s41 = sphi 0, %s25
    %s45 = sphi 0, %s45
    %s47 = sphi 0, %s45
    %s48 = sphi 0, %s47
    %s62 = sphi 0, %s48
    %s66 = sphi 0, %s66
    %s68 = sphi 0, %s66
    %s69 = sphi 0, %s68
    %s83 = sphi 0, %s69
    %s87 = sphi 0, %s87
    %s89 = sphi 0, %s87
    %s90 = sphi 0, %s89
    %s104 = sphi 0, %s90
    %s108 = sphi 0, %s108
    %s110 = sphi 0, %s108
    %s111 = sphi 0, %s110
    %s125 = sphi 0, %s111
    %s131 = sphi 0, %s133
    %s134 = sphi 0, %s131
    %s135 = sphi 0, %s134
    %s151 = sphi 0, %s135
  $region4: #{tpu_custom_call.1} parent=0 // loop_header_branch
    %14 = sbr.rel (%p12) target = $region8
  $region5: #{tpu_custom_call.1} parent=0 // loop_body
    %s16 = ssub.s32 %s11, 1
    %s17 = ssub.s32 %s11, 2
    %s18 = sadd.s32 %s11, 1
    %s19 = ssub.s32 %s11, %s18
    %p20 = scmp.eq.s32.totalorder %s19, 0
    %s22 = sadd.s32 %s21, 1
    %s23 = scalar_select %p20, %s21, %s22
    %p26 = pneg %p20
    %p27 = scmp.eq.s32.totalorder %s11, 1
    %p28 = por %p26, %p27
    %p29 = scmp.ne.s32.totalorder %s21, %s24
    %p30 = scmp.eq.s32.totalorder %s11, 0
    %p31 = por %p29, %p30
    %p32 = scmp.ne.s32.totalorder %s21, %s24
    %p33 = scmp.eq.s32.totalorder %s16, 1
    %p34 = por %p32, %p33
    %p35 = scmp.ne.s32.totalorder %s24, %s25
    %p36 = scmp.eq.s32.totalorder %s16, 0
    %p37 = por %p35, %p36
    %p38 = scmp.ne.s32.totalorder %s24, %s25
    %p39 = scmp.eq.s32.totalorder %s17, 1
    %p40 = por %p38, %p39
    %p42 = scmp.ne.s32.totalorder %s25, %s41
    %p43 = scmp.eq.s32.totalorder %s17, 0
    %p44 = por %p42, %p43
    %s46 = sadd.s32 %s45, 1
    %p49 = scmp.eq.s32.totalorder %s11, 1
    %p50 = scmp.ne.s32.totalorder %s45, %s47
    %p51 = scmp.eq.s32.totalorder %s11, 0
    %p52 = por %p50, %p51
    %p53 = scmp.ne.s32.totalorder %s45, %s47
    %p54 = scmp.eq.s32.totalorder %s16, 1
    %p55 = por %p53, %p54
    %p56 = scmp.ne.s32.totalorder %s47, %s48
    %p57 = scmp.eq.s32.totalorder %s16, 0
    %p58 = por %p56, %p57
    %p59 = scmp.ne.s32.totalorder %s47, %s48
    %p60 = scmp.eq.s32.totalorder %s17, 1
    %p61 = por %p59, %p60
    %p63 = scmp.ne.s32.totalorder %s48, %s62
    %p64 = scmp.eq.s32.totalorder %s17, 0
    %p65 = por %p63, %p64
    %s67 = sadd.s32 %s66, 1
    %p70 = scmp.eq.s32.totalorder %s11, 1
    %p71 = scmp.ne.s32.totalorder %s66, %s68
    %p72 = scmp.eq.s32.totalorder %s11, 0
    %p73 = por %p71, %p72
    %p74 = scmp.ne.s32.totalorder %s66, %s68
    %p75 = scmp.eq.s32.totalorder %s16, 1
    %p76 = por %p74, %p75
    %p77 = scmp.ne.s32.totalorder %s68, %s69
    %p78 = scmp.eq.s32.totalorder %s16, 0
    %p79 = por %p77, %p78
    %p80 = scmp.ne.s32.totalorder %s68, %s69
    %p81 = scmp.eq.s32.totalorder %s17, 1
    %p82 = por %p80, %p81
    %p84 = scmp.ne.s32.totalorder %s69, %s83
    %p85 = scmp.eq.s32.totalorder %s17, 0
    %p86 = por %p84, %p85
    %s88 = sadd.s32 %s87, 1
    %p91 = scmp.eq.s32.totalorder %s11, 1
    %p92 = scmp.ne.s32.totalorder %s87, %s89
    %p93 = scmp.eq.s32.totalorder %s11, 0
    %p94 = por %p92, %p93
    %p95 = scmp.ne.s32.totalorder %s87, %s89
    %p96 = scmp.eq.s32.totalorder %s16, 1
    %p97 = por %p95, %p96
    %p98 = scmp.ne.s32.totalorder %s89, %s90
    %p99 = scmp.eq.s32.totalorder %s16, 0
    %p100 = por %p98, %p99
    %p101 = scmp.ne.s32.totalorder %s89, %s90
    %p102 = scmp.eq.s32.totalorder %s17, 1
    %p103 = por %p101, %p102
    %p105 = scmp.ne.s32.totalorder %s90, %s104
    %p106 = scmp.eq.s32.totalorder %s17, 0
    %p107 = por %p105, %p106
    %s109 = sadd.s32 %s108, 1
    %p112 = scmp.eq.s32.totalorder %s11, 1
    %p113 = scmp.ne.s32.totalorder %s108, %s110
    %p114 = scmp.eq.s32.totalorder %s11, 0
    %p115 = por %p113, %p114
    %p116 = scmp.ne.s32.totalorder %s108, %s110
    %p117 = scmp.eq.s32.totalorder %s16, 1
    %p118 = por %p116, %p117
    %p119 = scmp.ne.s32.totalorder %s110, %s111
    %p120 = scmp.eq.s32.totalorder %s16, 0
    %p121 = por %p119, %p120
    %p122 = scmp.ne.s32.totalorder %s110, %s111
    %p123 = scmp.eq.s32.totalorder %s17, 1
    %p124 = por %p122, %p123
    %p126 = scmp.ne.s32.totalorder %s111, %s125
    %p127 = scmp.eq.s32.totalorder %s17, 0
    %p128 = por %p126, %p127
    %s129 = ssub.s32 %s11, %s18
    %p130 = scmp.eq.s32.totalorder %s129, 0
    %s132 = sadd.s32 %s131, 1
    %s133 = scalar_select %p130, %s131, %s132
    %p136 = pneg %p130
    %p137 = scmp.eq.s32.totalorder %s11, 1
    %p138 = por %p136, %p137
    %p139 = scmp.ne.s32.totalorder %s131, %s134
    %p140 = scmp.eq.s32.totalorder %s11, 0
    %p141 = por %p139, %p140
    %p142 = scmp.ne.s32.totalorder %s131, %s134
    %p143 = scmp.eq.s32.totalorder %s16, 1
    %p144 = por %p142, %p143
    %p145 = scmp.ne.s32.totalorder %s134, %s135
    %p146 = scmp.eq.s32.totalorder %s16, 0
    %p147 = por %p145, %p146
    %p148 = scmp.ne.s32.totalorder %s134, %s135
    %p149 = scmp.eq.s32.totalorder %s17, 1
    %p150 = por %p148, %p149
    %p152 = scmp.ne.s32.totalorder %s135, %s151
    %p153 = scmp.eq.s32.totalorder %s17, 0
    %p154 = por %p152, %p153
    %p155 = scmp.le.s32.totalorder 1, %s11
    %p156 = scmp.lt.s32.totalorder %s11, 3
    %p157 = pnand %p155, %p156
    %p158 = pneg %p157
    // Predicated region
    $region9: #{tpu_custom_call.1} parent=5 // pred_check
      _
    $region10: #{tpu_custom_call.1} parent=5 // pred_check_branch
      %160 = sbr.rel (%p157) target = $region12
    $region11: #{tpu_custom_call.1} parent=5 // pred_region
      %s161 = ssub.s32 %s11, 1
      // Predicated region
      $region13: #{tpu_custom_call.1} parent=11 // pred_check
        %p162 = pneg %p58
      $region14: #{tpu_custom_call.1} parent=11 // pred_check_branch
        %164 = sbr.rel (%p162) target = $region16
      $region15: #{tpu_custom_call.1} parent=11 // pred_region
        _
      $region16: #{tpu_custom_call.1} parent=11 // pred_fallthru
        _
      // Predicated region
      $region17: #{tpu_custom_call.1} parent=11 // pred_check
        %p165 = pneg %p79
      $region18: #{tpu_custom_call.1} parent=11 // pred_check_branch
        %167 = sbr.rel (%p165) target = $region20
      $region19: #{tpu_custom_call.1} parent=11 // pred_region
        _
      $region20: #{tpu_custom_call.1} parent=11 // pred_fallthru
        _
      // Predicated region
      $region21: #{tpu_custom_call.1} parent=11 // pred_check
        %p168 = pneg %p100
      $region22: #{tpu_custom_call.1} parent=11 // pred_check_branch
        %170 = sbr.rel (%p168) target = $region24
      $region23: #{tpu_custom_call.1} parent=11 // pred_region
        _
      $region24: #{tpu_custom_call.1} parent=11 // pred_fallthru
        _
      // Predicated region
      $region25: #{tpu_custom_call.1} parent=11 // pred_check
        %p171 = pneg %p121
      $region26: #{tpu_custom_call.1} parent=11 // pred_check_branch
        %173 = sbr.rel (%p171) target = $region28
      $region27: #{tpu_custom_call.1} parent=11 // pred_region
        _
      $region28: #{tpu_custom_call.1} parent=11 // pred_fallthru
        _
    $region12: #{tpu_custom_call.1} parent=5 // pred_fallthru
      _
    %p174 = scmp.lt.s32.totalorder %s11, 2
    // Predicated region
    $region29: #{tpu_custom_call.1} parent=5 // pred_check
      %p175 = pneg %p174
    $region30: #{tpu_custom_call.1} parent=5 // pred_check_branch
      %177 = sbr.rel (%p175) target = $region32
    $region31: #{tpu_custom_call.1} parent=5 // pred_region
      // Predicated region
      $region33: #{tpu_custom_call.1} parent=31 // pred_check
        %p178 = pneg %p31
      $region34: #{tpu_custom_call.1} parent=31 // pred_check_branch
        %180 = sbr.rel (%p178) target = $region36
      $region35: #{tpu_custom_call.1} parent=31 // pred_region
        %s181 = smul.u32 32, %s11
        %p182 = scmp.lt.s32.totalorder %s181, 63
        %s183 = scalar_select %p182, %s181, 63
        %s184 = smul.addr %s183, 8
        %s185 = scalar_lea.vmem %s0, %s184
        %s186 = smul.u32 32, %s11
      $region36: #{tpu_custom_call.1} parent=31 // pred_fallthru
        _
    $region32: #{tpu_custom_call.1} parent=5 // pred_fallthru
      _
    %p187 = scmp.le.s32.totalorder 1, %s11
    %p188 = scmp.lt.s32.totalorder %s11, 3
    %p189 = pnand %p187, %p188
    %p190 = pneg %p189
    // Predicated region
    $region37: #{tpu_custom_call.1} parent=5 // pred_check
      _
    $region38: #{tpu_custom_call.1} parent=5 // pred_check_branch
      %192 = sbr.rel (%p189) target = $region40
    $region39: #{tpu_custom_call.1} parent=5 // pred_region
      %s193 = ssub.s32 %s11, 1
      %s194 = smul.u32 32, %s16
      %p195 = scmp.lt.s32.totalorder %s194, 63
      %s196 = scalar_select %p195, %s194, 63
      %s197 = smul.addr %s196, 8
      %s198 = scalar_lea.vmem %s0, %s197
      %p199 = pneg %p37
      %p200 = pneg %p34
      %p201 = pneg %p58
      %p202 = pneg %p55
      %p203 = pneg %p79
      %p204 = pneg %p76
      %p205 = pneg %p100
      %p206 = pneg %p97
      %p207 = pneg %p121
      %p208 = pneg %p118
      %p209 = pneg %p147
      %p210 = pneg %p144
      %s211 = smul.u32 32, %s16
      %p212 = scmp.lt.s32.totalorder %s211, 63
      %s213 = scalar_select %p212, %s211, 63
      %s214 = smul.addr %s213, 8
      %s215 = scalar_lea.vmem %s5, %s214
      %s216 = smul.u32 32, %s16
      %p217 = scmp.lt.s32.totalorder %s216, 63
      %s218 = scalar_select %p217, %s216, 63
      %s219 = smul.addr %s218, 8
      %s220 = scalar_lea.vmem %s0, %s219
      %s221 = smul.u32 32, %s16
      %s222 = smul.u32 32, %s16
      %p223 = scmp.lt.s32.totalorder %s222, 63
      %s224 = scalar_select %p223, %s222, 63
      %s225 = smul.addr %s224, 8
      %s226 = scalar_lea.vmem %s5, %s225
      %s227 = smul.u32 32, %s16
      %v228 = vld [vmem:[%s220] sm:$0xff]
      %v229 = vld [vmem:[%s220 + $0x8] sm:$0xff]
      %v230 = vld [vmem:[%s220 + $0x10] sm:$0xff]
      %v231 = vld [vmem:[%s220 + $0x18] sm:$0xff]
      %v232 = vld [vmem:[%s220 + $0x20] sm:$0xff]
      %v233 = vld [vmem:[%s220 + $0x28] sm:$0xff]
      %v234 = vld [vmem:[%s220 + $0x30] sm:$0xff]
      %v235 = vld [vmem:[%s220 + $0x38] sm:$0xff]
      %v236 = vld [vmem:[%s220 + $0x40] sm:$0xff]
      %v237 = vld [vmem:[%s220 + $0x48] sm:$0xff]
      %v238 = vld [vmem:[%s220 + $0x50] sm:$0xff]
      %v239 = vld [vmem:[%s220 + $0x58] sm:$0xff]
      %v240 = vld [vmem:[%s220 + $0x60] sm:$0xff]
      %v241 = vld [vmem:[%s220 + $0x68] sm:$0xff]
      %v242 = vld [vmem:[%s220 + $0x70] sm:$0xff]
      %v243 = vld [vmem:[%s220 + $0x78] sm:$0xff]
      %v244 = vld [vmem:[%s220 + $0x80] sm:$0xff]
      %v245 = vld [vmem:[%s220 + $0x88] sm:$0xff]
      %v246 = vld [vmem:[%s220 + $0x90] sm:$0xff]
      %v247 = vld [vmem:[%s220 + $0x98] sm:$0xff]
      %v248 = vld [vmem:[%s220 + $0xa0] sm:$0xff]
      %v249 = vld [vmem:[%s220 + $0xa8] sm:$0xff]
      %v250 = vld [vmem:[%s220 + $0xb0] sm:$0xff]
      %v251 = vld [vmem:[%s220 + $0xb8] sm:$0xff]
      %v252 = vld [vmem:[%s220 + $0xc0] sm:$0xff]
      %v253 = vld [vmem:[%s220 + $0xc8] sm:$0xff]
      %v254 = vld [vmem:[%s220 + $0xd0] sm:$0xff]
      %v255 = vld [vmem:[%s220 + $0xd8] sm:$0xff]
      %v256 = vld [vmem:[%s220 + $0xe0] sm:$0xff]
      %v257 = vld [vmem:[%s220 + $0xe8] sm:$0xff]
      %v258 = vld [vmem:[%s220 + $0xf0] sm:$0xff]
      %v259 = vld [vmem:[%s220 + $0xf8] sm:$0xff]
      %v260 = vld [vmem:[%s1] sm:$0x3]
      %262 = vset.pattern.permute.xlu0 0
      %263 = vperm.xlu0 %262, %v228
      %v264 = vpop.permute.xlu0 %263
      %267 = vset.pattern.permute.xlu0 0
      %268 = vperm.xlu0 %267, %v229
      %v269 = vpop.permute.xlu0 %268
      %272 = vset.pattern.permute.xlu0 0
      %273 = vperm.xlu0 %272, %v230
      %v274 = vpop.permute.xlu0 %273
      %277 = vset.pattern.permute.xlu0 0
      %278 = vperm.xlu0 %277, %v231
      %v279 = vpop.permute.xlu0 %278
      %282 = vset.pattern.permute.xlu0 0
      %283 = vperm.xlu0 %282, %v232
      %v284 = vpop.permute.xlu0 %283
      %287 = vset.pattern.permute.xlu0 0
      %288 = vperm.xlu0 %287, %v233
      %v289 = vpop.permute.xlu0 %288
      %292 = vset.pattern.permute.xlu0 0
      %293 = vperm.xlu0 %292, %v234
      %v294 = vpop.permute.xlu0 %293
      %297 = vset.pattern.permute.xlu0 0
      %298 = vperm.xlu0 %297, %v235
      %v299 = vpop.permute.xlu0 %298
      %302 = vset.pattern.permute.xlu0 0
      %303 = vperm.xlu0 %302, %v236
      %v304 = vpop.permute.xlu0 %303
      %307 = vset.pattern.permute.xlu0 0
      %308 = vperm.xlu0 %307, %v237
      %v309 = vpop.permute.xlu0 %308
      %312 = vset.pattern.permute.xlu0 0
      %313 = vperm.xlu0 %312, %v238
      %v314 = vpop.permute.xlu0 %313
      %317 = vset.pattern.permute.xlu0 0
      %318 = vperm.xlu0 %317, %v239
      %v319 = vpop.permute.xlu0 %318
      %322 = vset.pattern.permute.xlu0 0
      %323 = vperm.xlu0 %322, %v240
      %v324 = vpop.permute.xlu0 %323
      %327 = vset.pattern.permute.xlu0 0
      %328 = vperm.xlu0 %327, %v241
      %v329 = vpop.permute.xlu0 %328
      %332 = vset.pattern.permute.xlu0 0
      %333 = vperm.xlu0 %332, %v242
      %v334 = vpop.permute.xlu0 %333
      %337 = vset.pattern.permute.xlu0 0
      %338 = vperm.xlu0 %337, %v243
      %v339 = vpop.permute.xlu0 %338
      %342 = vset.pattern.permute.xlu0 0
      %343 = vperm.xlu0 %342, %v244
      %v344 = vpop.permute.xlu0 %343
      %347 = vset.pattern.permute.xlu0 0
      %348 = vperm.xlu0 %347, %v245
      %v349 = vpop.permute.xlu0 %348
      %352 = vset.pattern.permute.xlu0 0
      %353 = vperm.xlu0 %352, %v246
      %v354 = vpop.permute.xlu0 %353
      %357 = vset.pattern.permute.xlu0 0
      %358 = vperm.xlu0 %357, %v247
      %v359 = vpop.permute.xlu0 %358
      %362 = vset.pattern.permute.xlu0 0
      %363 = vperm.xlu0 %362, %v248
      %v364 = vpop.permute.xlu0 %363
      %367 = vset.pattern.permute.xlu0 0
      %368 = vperm.xlu0 %367, %v249
      %v369 = vpop.permute.xlu0 %368
      %372 = vset.pattern.permute.xlu0 0
      %373 = vperm.xlu0 %372, %v250
      %v374 = vpop.permute.xlu0 %373
      %377 = vset.pattern.permute.xlu0 0
      %378 = vperm.xlu0 %377, %v251
      %v379 = vpop.permute.xlu0 %378
      %382 = vset.pattern.permute.xlu0 0
      %383 = vperm.xlu0 %382, %v252
      %v384 = vpop.permute.xlu0 %383
      %387 = vset.pattern.permute.xlu0 0
      %388 = vperm.xlu0 %387, %v253
      %v389 = vpop.permute.xlu0 %388
      %392 = vset.pattern.permute.xlu0 0
      %393 = vperm.xlu0 %392, %v254
      %v394 = vpop.permute.xlu0 %393
      %397 = vset.pattern.permute.xlu0 0
      %398 = vperm.xlu0 %397, %v255
      %v399 = vpop.permute.xlu0 %398
      %402 = vset.pattern.permute.xlu0 0
      %403 = vperm.xlu0 %402, %v256
      %v404 = vpop.permute.xlu0 %403
      %407 = vset.pattern.permute.xlu0 0
      %408 = vperm.xlu0 %407, %v257
      %v409 = vpop.permute.xlu0 %408
      %412 = vset.pattern.permute.xlu0 0
      %413 = vperm.xlu0 %412, %v258
      %v414 = vpop.permute.xlu0 %413
      %417 = vset.pattern.permute.xlu0 0
      %418 = vperm.xlu0 %417, %v259
      %v419 = vpop.permute.xlu0 %418
      %v421 = vlaneseq
      %v422 = vshrl.u32 %v421, 7
      %v423 = vsub.s32 0, %v422
      %v424 = vrot.slane %v260, %v423
      %v425 = vmul.f32 %v264, %v424
      %v426 = vmul.f32 %v269, %v424
      %v427 = vmul.f32 %v274, %v424
      %v428 = vmul.f32 %v279, %v424
      %v429 = vmul.f32 %v284, %v424
      %v430 = vmul.f32 %v289, %v424
      %v431 = vmul.f32 %v294, %v424
      %v432 = vmul.f32 %v299, %v424
      %v433 = vmul.f32 %v304, %v424
      %v434 = vmul.f32 %v309, %v424
      %v435 = vmul.f32 %v314, %v424
      %v436 = vmul.f32 %v319, %v424
      %v437 = vmul.f32 %v324, %v424
      %v438 = vmul.f32 %v329, %v424
      %v439 = vmul.f32 %v334, %v424
      %v440 = vmul.f32 %v339, %v424
      %v441 = vmul.f32 %v344, %v424
      %v442 = vmul.f32 %v349, %v424
      %v443 = vmul.f32 %v354, %v424
      %v444 = vmul.f32 %v359, %v424
      %v445 = vmul.f32 %v364, %v424
      %v446 = vmul.f32 %v369, %v424
      %v447 = vmul.f32 %v374, %v424
      %v448 = vmul.f32 %v379, %v424
      %v449 = vmul.f32 %v384, %v424
      %v450 = vmul.f32 %v389, %v424
      %v451 = vmul.f32 %v394, %v424
      %v452 = vmul.f32 %v399, %v424
      %v453 = vmul.f32 %v404, %v424
      %v454 = vmul.f32 %v409, %v424
      %v455 = vmul.f32 %v414, %v424
      %v456 = vmul.f32 %v419, %v424
      %457 = vset.pattern.permute.xlu0 1
      %458 = vperm.xlu0 %457, %v228
      %v459 = vpop.permute.xlu0 %458
      %461 = vset.pattern.permute.xlu0 1
      %462 = vperm.xlu0 %461, %v229
      %v463 = vpop.permute.xlu0 %462
      %465 = vset.pattern.permute.xlu0 1
      %466 = vperm.xlu0 %465, %v230
      %v467 = vpop.permute.xlu0 %466
      %469 = vset.pattern.permute.xlu0 1
      %470 = vperm.xlu0 %469, %v231
      %v471 = vpop.permute.xlu0 %470
      %473 = vset.pattern.permute.xlu0 1
      %474 = vperm.xlu0 %473, %v232
      %v475 = vpop.permute.xlu0 %474
      %477 = vset.pattern.permute.xlu0 1
      %478 = vperm.xlu0 %477, %v233
      %v479 = vpop.permute.xlu0 %478
      %481 = vset.pattern.permute.xlu0 1
      %482 = vperm.xlu0 %481, %v234
      %v483 = vpop.permute.xlu0 %482
      %485 = vset.pattern.permute.xlu0 1
      %486 = vperm.xlu0 %485, %v235
      %v487 = vpop.permute.xlu0 %486
      %489 = vset.pattern.permute.xlu0 1
      %490 = vperm.xlu0 %489, %v236
      %v491 = vpop.permute.xlu0 %490
      %493 = vset.pattern.permute.xlu0 1
      %494 = vperm.xlu0 %493, %v237
      %v495 = vpop.permute.xlu0 %494
      %497 = vset.pattern.permute.xlu0 1
      %498 = vperm.xlu0 %497, %v238
      %v499 = vpop.permute.xlu0 %498
      %501 = vset.pattern.permute.xlu0 1
      %502 = vperm.xlu0 %501, %v239
      %v503 = vpop.permute.xlu0 %502
      %505 = vset.pattern.permute.xlu0 1
      %506 = vperm.xlu0 %505, %v240
      %v507 = vpop.permute.xlu0 %506
      %509 = vset.pattern.permute.xlu0 1
      %510 = vperm.xlu0 %509, %v241
      %v511 = vpop.permute.xlu0 %510
      %513 = vset.pattern.permute.xlu0 1
      %514 = vperm.xlu0 %513, %v242
      %v515 = vpop.permute.xlu0 %514
      %517 = vset.pattern.permute.xlu0 1
      %518 = vperm.xlu0 %517, %v243
      %v519 = vpop.permute.xlu0 %518
      %521 = vset.pattern.permute.xlu0 1
      %522 = vperm.xlu0 %521, %v244
      %v523 = vpop.permute.xlu0 %522
      %525 = vset.pattern.permute.xlu0 1
      %526 = vperm.xlu0 %525, %v245
      %v527 = vpop.permute.xlu0 %526
      %529 = vset.pattern.permute.xlu0 1
      %530 = vperm.xlu0 %529, %v246
      %v531 = vpop.permute.xlu0 %530
      %533 = vset.pattern.permute.xlu0 1
      %534 = vperm.xlu0 %533, %v247
      %v535 = vpop.permute.xlu0 %534
      %537 = vset.pattern.permute.xlu0 1
      %538 = vperm.xlu0 %537, %v248
      %v539 = vpop.permute.xlu0 %538
      %541 = vset.pattern.permute.xlu0 1
      %542 = vperm.xlu0 %541, %v249
      %v543 = vpop.permute.xlu0 %542
      %545 = vset.pattern.permute.xlu0 1
      %546 = vperm.xlu0 %545, %v250
      %v547 = vpop.permute.xlu0 %546
      %549 = vset.pattern.permute.xlu0 1
      %550 = vperm.xlu0 %549, %v251
      %v551 = vpop.permute.xlu0 %550
      %553 = vset.pattern.permute.xlu0 1
      %554 = vperm.xlu0 %553, %v252
      %v555 = vpop.permute.xlu0 %554
      %557 = vset.pattern.permute.xlu0 1
      %558 = vperm.xlu0 %557, %v253
      %v559 = vpop.permute.xlu0 %558
      %561 = vset.pattern.permute.xlu0 1
      %562 = vperm.xlu0 %561, %v254
      %v563 = vpop.permute.xlu0 %562
      %565 = vset.pattern.permute.xlu0 1
      %566 = vperm.xlu0 %565, %v255
      %v567 = vpop.permute.xlu0 %566
      %569 = vset.pattern.permute.xlu0 1
      %570 = vperm.xlu0 %569, %v256
      %v571 = vpop.permute.xlu0 %570
      %573 = vset.pattern.permute.xlu0 1
      %574 = vperm.xlu0 %573, %v257
      %v575 = vpop.permute.xlu0 %574
      %577 = vset.pattern.permute.xlu0 1
      %578 = vperm.xlu0 %577, %v258
      %v579 = vpop.permute.xlu0 %578
      %581 = vset.pattern.permute.xlu0 1
      %582 = vperm.xlu0 %581, %v259
      %v583 = vpop.permute.xlu0 %582
      %v585 = vlaneseq
      %v586 = vshrl.u32 %v585, 7
      %v587 = vsub.s32 1, %v586
      %v588 = vrot.slane %v260, %v587
      %v589 = vmul.f32 %v459, %v588
      %v590 = vmul.f32 %v463, %v588
      %v591 = vmul.f32 %v467, %v588
      %v592 = vmul.f32 %v471, %v588
      %v593 = vmul.f32 %v475, %v588
      %v594 = vmul.f32 %v479, %v588
      %v595 = vmul.f32 %v483, %v588
      %v596 = vmul.f32 %v487, %v588
      %v597 = vmul.f32 %v491, %v588
      %v598 = vmul.f32 %v495, %v588
      %v599 = vmul.f32 %v499, %v588
      %v600 = vmul.f32 %v503, %v588
      %v601 = vmul.f32 %v507, %v588
      %v602 = vmul.f32 %v511, %v588
      %v603 = vmul.f32 %v515, %v588
      %v604 = vmul.f32 %v519, %v588
      %v605 = vmul.f32 %v523, %v588
      %v606 = vmul.f32 %v527, %v588
      %v607 = vmul.f32 %v531, %v588
      %v608 = vmul.f32 %v535, %v588
      %v609 = vmul.f32 %v539, %v588
      %v610 = vmul.f32 %v543, %v588
      %v611 = vmul.f32 %v547, %v588
      %v612 = vmul.f32 %v551, %v588
      %v613 = vmul.f32 %v555, %v588
      %v614 = vmul.f32 %v559, %v588
      %v615 = vmul.f32 %v563, %v588
      %v616 = vmul.f32 %v567, %v588
      %v617 = vmul.f32 %v571, %v588
      %v618 = vmul.f32 %v575, %v588
      %v619 = vmul.f32 %v579, %v588
      %v620 = vmul.f32 %v583, %v588
      %v621 = vadd.f32 %v425, %v589
      %v622 = vadd.f32 %v426, %v590
      %v623 = vadd.f32 %v427, %v591
      %v624 = vadd.f32 %v428, %v592
      %v625 = vadd.f32 %v429, %v593
      %v626 = vadd.f32 %v430, %v594
      %v627 = vadd.f32 %v431, %v595
      %v628 = vadd.f32 %v432, %v596
      %v629 = vadd.f32 %v433, %v597
      %v630 = vadd.f32 %v434, %v598
      %v631 = vadd.f32 %v435, %v599
      %v632 = vadd.f32 %v436, %v600
      %v633 = vadd.f32 %v437, %v601
      %v634 = vadd.f32 %v438, %v602
      %v635 = vadd.f32 %v439, %v603
      %v636 = vadd.f32 %v440, %v604
      %v637 = vadd.f32 %v441, %v605
      %v638 = vadd.f32 %v442, %v606
      %v639 = vadd.f32 %v443, %v607
      %v640 = vadd.f32 %v444, %v608
      %v641 = vadd.f32 %v445, %v609
      %v642 = vadd.f32 %v446, %v610
      %v643 = vadd.f32 %v447, %v611
      %v644 = vadd.f32 %v448, %v612
      %v645 = vadd.f32 %v449, %v613
      %v646 = vadd.f32 %v450, %v614
      %v647 = vadd.f32 %v451, %v615
      %v648 = vadd.f32 %v452, %v616
      %v649 = vadd.f32 %v453, %v617
      %v650 = vadd.f32 %v454, %v618
      %v651 = vadd.f32 %v455, %v619
      %v652 = vadd.f32 %v456, %v620
      %v653 = vlaneseq
      %v654 = vand.u32 %v653, 127
      %vm655 = vcmp.lt.s32.totalorder %v654, 32
      %v656 = vld [vmem:[%s2] sm:$0x1]
      %v658 = vlaneseq
      %v659 = vshrl.u32 %v658, 7
      %v660 = vsub.s32 0, %v659
      %v661 = vrot.slane %v656, %v660
      %v663 = vadd.f32 %v621, %v661
      %v664 = vadd.f32 %v622, %v661
      %v665 = vadd.f32 %v623, %v661
      %v666 = vadd.f32 %v624, %v661
      %v667 = vadd.f32 %v625, %v661
      %v668 = vadd.f32 %v626, %v661
      %v669 = vadd.f32 %v627, %v661
      %v670 = vadd.f32 %v628, %v661
      %v671 = vadd.f32 %v629, %v661
      %v672 = vadd.f32 %v630, %v661
      %v673 = vadd.f32 %v631, %v661
      %v674 = vadd.f32 %v632, %v661
      %v675 = vadd.f32 %v633, %v661
      %v676 = vadd.f32 %v634, %v661
      %v677 = vadd.f32 %v635, %v661
      %v678 = vadd.f32 %v636, %v661
      %v679 = vadd.f32 %v637, %v661
      %v680 = vadd.f32 %v638, %v661
      %v681 = vadd.f32 %v639, %v661
      %v682 = vadd.f32 %v640, %v661
      %v683 = vadd.f32 %v641, %v661
      %v684 = vadd.f32 %v642, %v661
      %v685 = vadd.f32 %v643, %v661
      %v686 = vadd.f32 %v644, %v661
      %v687 = vadd.f32 %v645, %v661
      %v688 = vadd.f32 %v646, %v661
      %v689 = vadd.f32 %v647, %v661
      %v690 = vadd.f32 %v648, %v661
      %v691 = vadd.f32 %v649, %v661
      %v692 = vadd.f32 %v650, %v661
      %v693 = vadd.f32 %v651, %v661
      %v694 = vadd.f32 %v652, %v661
      %v695 = vtanh.pop %v663
      %v696 = vtanh.pop %v664
      %v697 = vtanh.pop %v665
      %v698 = vtanh.pop %v666
      %v699 = vtanh.pop %v667
      %v700 = vtanh.pop %v668
      %v701 = vtanh.pop %v669
      %v702 = vtanh.pop %v670
      %v703 = vtanh.pop %v671
      %v704 = vtanh.pop %v672
      %v705 = vtanh.pop %v673
      %v706 = vtanh.pop %v674
      %v707 = vtanh.pop %v675
      %v708 = vtanh.pop %v676
      %v709 = vtanh.pop %v677
      %v710 = vtanh.pop %v678
      %v711 = vtanh.pop %v679
      %v712 = vtanh.pop %v680
      %v713 = vtanh.pop %v681
      %v714 = vtanh.pop %v682
      %v715 = vtanh.pop %v683
      %v716 = vtanh.pop %v684
      %v717 = vtanh.pop %v685
      %v718 = vtanh.pop %v686
      %v719 = vtanh.pop %v687
      %v720 = vtanh.pop %v688
      %v721 = vtanh.pop %v689
      %v722 = vtanh.pop %v690
      %v723 = vtanh.pop %v691
      %v724 = vtanh.pop %v692
      %v725 = vtanh.pop %v693
      %v726 = vtanh.pop %v694
      %v727 = vsel %vm655, %v695, %v621
      %v728 = vsel %vm655, %v696, %v622
      %v729 = vsel %vm655, %v697, %v623
      %v730 = vsel %vm655, %v698, %v624
      %v731 = vsel %vm655, %v699, %v625
      %v732 = vsel %vm655, %v700, %v626
      %v733 = vsel %vm655, %v701, %v627
      %v734 = vsel %vm655, %v702, %v628
      %v735 = vsel %vm655, %v703, %v629
      %v736 = vsel %vm655, %v704, %v630
      %v737 = vsel %vm655, %v705, %v631
      %v738 = vsel %vm655, %v706, %v632
      %v739 = vsel %vm655, %v707, %v633
      %v740 = vsel %vm655, %v708, %v634
      %v741 = vsel %vm655, %v709, %v635
      %v742 = vsel %vm655, %v710, %v636
      %v743 = vsel %vm655, %v711, %v637
      %v744 = vsel %vm655, %v712, %v638
      %v745 = vsel %vm655, %v713, %v639
      %v746 = vsel %vm655, %v714, %v640
      %v747 = vsel %vm655, %v715, %v641
      %v748 = vsel %vm655, %v716, %v642
      %v749 = vsel %vm655, %v717, %v643
      %v750 = vsel %vm655, %v718, %v644
      %v751 = vsel %vm655, %v719, %v645
      %v752 = vsel %vm655, %v720, %v646
      %v753 = vsel %vm655, %v721, %v647
      %v754 = vsel %vm655, %v722, %v648
      %v755 = vsel %vm655, %v723, %v649
      %v756 = vsel %vm655, %v724, %v650
      %v757 = vsel %vm655, %v725, %v651
      %v758 = vsel %vm655, %v726, %v652
      %v759 = vld [vmem:[%s3] sm:$0xff]
      %v760 = vld [vmem:[%s3 + $0x8] sm:$0xff]
      %v761 = vld [vmem:[%s3 + $0x10] sm:$0xff]
      %v762 = vld [vmem:[%s3 + $0x18] sm:$0xff]
      %v763 = vld [vmem:[%s3 + $0x20] sm:$0x3]
      %v764 = vld [vmem:[%s4] sm:$0x1]
      %v766 = vlaneseq
      %v767 = vshrl.u32 %v766, 7
      %v768 = vsub.s32 0, %v767
      %v769 = vrot.slane %v764, %v768
      %vm771 = vcmask 277504
      %v773 = vsel %vm771, %v727, 0
      %v776 = vsel %vm771, %v728, 0
      %v779 = vsel %vm771, %v729, 0
      %v782 = vsel %vm771, %v730, 0
      %v785 = vsel %vm771, %v731, 0
      %v788 = vsel %vm771, %v732, 0
      %v791 = vsel %vm771, %v733, 0
      %v794 = vsel %vm771, %v734, 0
      %v797 = vsel %vm771, %v735, 0
      %v800 = vsel %vm771, %v736, 0
      %v803 = vsel %vm771, %v737, 0
      %v806 = vsel %vm771, %v738, 0
      %v809 = vsel %vm771, %v739, 0
      %v812 = vsel %vm771, %v740, 0
      %v815 = vsel %vm771, %v741, 0
      %v818 = vsel %vm771, %v742, 0
      %v821 = vsel %vm771, %v743, 0
      %v824 = vsel %vm771, %v744, 0
      %v827 = vsel %vm771, %v745, 0
      %v830 = vsel %vm771, %v746, 0
      %v833 = vsel %vm771, %v747, 0
      %v836 = vsel %vm771, %v748, 0
      %v839 = vsel %vm771, %v749, 0
      %v842 = vsel %vm771, %v750, 0
      %v845 = vsel %vm771, %v751, 0
      %v848 = vsel %vm771, %v752, 0
      %v851 = vsel %vm771, %v753, 0
      %v854 = vsel %vm771, %v754, 0
      %v857 = vsel %vm771, %v755, 0
      %v860 = vsel %vm771, %v756, 0
      %v863 = vsel %vm771, %v757, 0
      %v866 = vsel %vm771, %v758, 0
      %vm868 = vcmask 1041408
      %v870 = vsel %vm868, %v763, 0
      %872 = vmatprep.subr.mxu0 0.0
      %873 = vmatpush1.msra.mxu0 0.0
      %874 = vmatprep.subr.mxu0 0.0
      %875 = vmatpush1.msra.mxu0 0.0
      %876 = vmatprep.subr.mxu0 0.0
      %877 = vmatpush1.msra.mxu0 0.0
      %878 = vmatprep.subr.mxu0 0.0
      %879 = vmatpush1.msra.mxu0 0.0
      %880 = vmatprep.subr.mxu0 0.0
      %881 = vmatpush1.msra.mxu0 0.0
      %882 = vmatprep.subr.mxu0 0.0
      %883 = vmatpush1.msra.mxu0 0.0
      %884 = vmatprep.subr.mxu0 0.0
      %885 = vmatpush1.msra.mxu0 0.0
      %886 = vmatprep.subr.mxu0 0.0
      %887 = vmatpush1.msra.mxu0 0.0
      %888 = vmatprep.subr.mxu0 0.0
      %889 = vmatpush1.msra.mxu0 0.0
      %890 = vmatprep.subr.mxu0 0.0
      %891 = vmatpush1.msra.mxu0 0.0
      %892 = vmatprep.subr.mxu0 0.0
      %893 = vmatpush1.msra.mxu0 0.0
      %894 = vmatprep.subr.mxu0 0.0
      %895 = vmatpush1.msra.mxu0 %v870
      %896 = vmatprep.subr.mxu0 0.0
      %897 = vmatpush1.msra.mxu0 %v762
      %898 = vmatprep.subr.mxu0 0.0
      %899 = vmatpush1.msra.mxu0 %v761
      %900 = vmatprep.subr.mxu0 0.0
      %901 = vmatpush1.msra.mxu0 %v760
      %902 = vmatprep.subr.mxu0 0.0
      %903 = vmatpush1.msra.mxu0 %v759
      %904 = vmatprep.subr.mxu0 0.0
      %905 = vmatpush2.msra.mxu0 0.0
      %906 = vmatprep.subr.mxu0 0.0
      %907 = vmatpush2.msra.mxu0 0.0
      %908 = vmatprep.subr.mxu0 0.0
      %909 = vmatpush2.msra.mxu0 0.0
      %910 = vmatprep.subr.mxu0 0.0
      %911 = vmatpush2.msra.mxu0 0.0
      %912 = vmatprep.subr.mxu0 0.0
      %913 = vmatpush2.msra.mxu0 0.0
      %914 = vmatprep.subr.mxu0 0.0
      %915 = vmatpush2.msra.mxu0 0.0
      %916 = vmatprep.subr.mxu0 0.0
      %917 = vmatpush2.msra.mxu0 0.0
      %918 = vmatprep.subr.mxu0 0.0
      %919 = vmatpush2.msra.mxu0 0.0
      %920 = vmatprep.subr.mxu0 0.0
      %921 = vmatpush2.msra.mxu0 0.0
      %922 = vmatprep.subr.mxu0 0.0
      %923 = vmatpush2.msra.mxu0 0.0
      %924 = vmatprep.subr.mxu0 0.0
      %925 = vmatpush2.msra.mxu0 0.0
      %926 = vmatprep.subr.mxu0 0.0
      %927 = vmatpush2.msra.mxu0 0.0
      %928 = vmatprep.subr.mxu0 0.0
      %929 = vmatpush2.msra.mxu0 0.0
      %930 = vmatprep.subr.mxu0 0.0
      %931 = vmatpush2.msra.mxu0 0.0
      %932 = vmatprep.subr.mxu0 0.0
      %933 = vmatpush2.msra.mxu0 0.0
      %934 = vmatprep.subr.mxu0 0.0
      %935 = vmatpush2.msra.mxu0 0.0
      %936 = vmatprep.mubr.f32.mxu0 0.0
      %937 = vmatmul.mubr.f32.gmra.mxu0 %v773
      %v938 = vpop.f32.mrf.mxu0
      %v939 = vadd.f32 %v769, %v938
      %v940 = vpop.f32.mrf.mxu0
      %941 = vmatprep.mubr.f32.mxu0 0.0
      %942 = vmatmul.mubr.f32.gmra.mxu0 %v776
      %v943 = vpop.f32.mrf.mxu0
      %v944 = vadd.f32 %v769, %v943
      %v945 = vpop.f32.mrf.mxu0
      %946 = vmatprep.mubr.f32.mxu0 0.0
      %947 = vmatmul.mubr.f32.gmra.mxu0 %v779
      %v948 = vpop.f32.mrf.mxu0
      %v949 = vadd.f32 %v769, %v948
      %v950 = vpop.f32.mrf.mxu0
      %951 = vmatprep.mubr.f32.mxu0 0.0
      %952 = vmatmul.mubr.f32.gmra.mxu0 %v782
      %v953 = vpop.f32.mrf.mxu0
      %v954 = vadd.f32 %v769, %v953
      %v955 = vpop.f32.mrf.mxu0
      %956 = vmatprep.mubr.f32.mxu0 0.0
      %957 = vmatmul.mubr.f32.gmra.mxu0 %v785
      %v958 = vpop.f32.mrf.mxu0
      %v959 = vadd.f32 %v769, %v958
      %v960 = vpop.f32.mrf.mxu0
      %961 = vmatprep.mubr.f32.mxu0 0.0
      %962 = vmatmul.mubr.f32.gmra.mxu0 %v788
      %v963 = vpop.f32.mrf.mxu0
      %v964 = vadd.f32 %v769, %v963
      %v965 = vpop.f32.mrf.mxu0
      %966 = vmatprep.mubr.f32.mxu0 0.0
      %967 = vmatmul.mubr.f32.gmra.mxu0 %v791
      %v968 = vpop.f32.mrf.mxu0
      %v969 = vadd.f32 %v769, %v968
      %v970 = vpop.f32.mrf.mxu0
      %971 = vmatprep.mubr.f32.mxu0 0.0
      %972 = vmatmul.mubr.f32.gmra.mxu0 %v794
      %v973 = vpop.f32.mrf.mxu0
      %v974 = vadd.f32 %v769, %v973
      %v975 = vpop.f32.mrf.mxu0
      %976 = vmatprep.mubr.f32.mxu0 0.0
      %977 = vmatmul.mubr.f32.gmra.mxu0 %v797
      %v978 = vpop.f32.mrf.mxu0
      %v979 = vadd.f32 %v769, %v978
      %v980 = vpop.f32.mrf.mxu0
      %981 = vmatprep.mubr.f32.mxu0 0.0
      %982 = vmatmul.mubr.f32.gmra.mxu0 %v800
      %v983 = vpop.f32.mrf.mxu0
      %v984 = vadd.f32 %v769, %v983
      %v985 = vpop.f32.mrf.mxu0
      %986 = vmatprep.mubr.f32.mxu0 0.0
      %987 = vmatmul.mubr.f32.gmra.mxu0 %v803
      %v988 = vpop.f32.mrf.mxu0
      %v989 = vadd.f32 %v769, %v988
      %v990 = vpop.f32.mrf.mxu0
      %991 = vmatprep.mubr.f32.mxu0 0.0
      %992 = vmatmul.mubr.f32.gmra.mxu0 %v806
      %v993 = vpop.f32.mrf.mxu0
      %v994 = vadd.f32 %v769, %v993
      %v995 = vpop.f32.mrf.mxu0
      %996 = vmatprep.mubr.f32.mxu0 0.0
      %997 = vmatmul.mubr.f32.gmra.mxu0 %v809
      %v998 = vpop.f32.mrf.mxu0
      %v999 = vadd.f32 %v769, %v998
      %v1000 = vpop.f32.mrf.mxu0
      %1001 = vmatprep.mubr.f32.mxu0 0.0
      %1002 = vmatmul.mubr.f32.gmra.mxu0 %v812
      %v1003 = vpop.f32.mrf.mxu0
      %v1004 = vadd.f32 %v769, %v1003
      %v1005 = vpop.f32.mrf.mxu0
      %1006 = vmatprep.mubr.f32.mxu0 0.0
      %1007 = vmatmul.mubr.f32.gmra.mxu0 %v815
      %v1008 = vpop.f32.mrf.mxu0
      %v1009 = vadd.f32 %v769, %v1008
      %v1010 = vpop.f32.mrf.mxu0
      %1011 = vmatprep.mubr.f32.mxu0 0.0
      %1012 = vmatmul.mubr.f32.gmra.mxu0 %v818
      %v1013 = vpop.f32.mrf.mxu0
      %v1014 = vadd.f32 %v769, %v1013
      %v1015 = vpop.f32.mrf.mxu0
      %1016 = vmatprep.mubr.f32.mxu0 0.0
      %1017 = vmatmul.mubr.f32.gmra.mxu0 %v821
      %v1018 = vpop.f32.mrf.mxu0
      %v1019 = vadd.f32 %v769, %v1018
      %v1020 = vpop.f32.mrf.mxu0
      %1021 = vmatprep.mubr.f32.mxu0 0.0
      %1022 = vmatmul.mubr.f32.gmra.mxu0 %v824
      %v1023 = vpop.f32.mrf.mxu0
      %v1024 = vadd.f32 %v769, %v1023
      %v1025 = vpop.f32.mrf.mxu0
      %1026 = vmatprep.mubr.f32.mxu0 0.0
      %1027 = vmatmul.mubr.f32.gmra.mxu0 %v827
      %v1028 = vpop.f32.mrf.mxu0
      %v1029 = vadd.f32 %v769, %v1028
      %v1030 = vpop.f32.mrf.mxu0
      %1031 = vmatprep.mubr.f32.mxu0 0.0
      %1032 = vmatmul.mubr.f32.gmra.mxu0 %v830
      %v1033 = vpop.f32.mrf.mxu0
      %v1034 = vadd.f32 %v769, %v1033
      %v1035 = vpop.f32.mrf.mxu0
      %1036 = vmatprep.mubr.f32.mxu0 0.0
      %1037 = vmatmul.mubr.f32.gmra.mxu0 %v833
      %v1038 = vpop.f32.mrf.mxu0
      %v1039 = vadd.f32 %v769, %v1038
      %v1040 = vpop.f32.mrf.mxu0
      %1041 = vmatprep.mubr.f32.mxu0 0.0
      %1042 = vmatmul.mubr.f32.gmra.mxu0 %v836
      %v1043 = vpop.f32.mrf.mxu0
      %v1044 = vadd.f32 %v769, %v1043
      %v1045 = vpop.f32.mrf.mxu0
      %1046 = vmatprep.mubr.f32.mxu0 0.0
      %1047 = vmatmul.mubr.f32.gmra.mxu0 %v839
      %v1048 = vpop.f32.mrf.mxu0
      %v1049 = vadd.f32 %v769, %v1048
      %v1050 = vpop.f32.mrf.mxu0
      %1051 = vmatprep.mubr.f32.mxu0 0.0
      %1052 = vmatmul.mubr.f32.gmra.mxu0 %v842
      %v1053 = vpop.f32.mrf.mxu0
      %v1054 = vadd.f32 %v769, %v1053
      %v1055 = vpop.f32.mrf.mxu0
      %1056 = vmatprep.mubr.f32.mxu0 0.0
      %1057 = vmatmul.mubr.f32.gmra.mxu0 %v845
      %v1058 = vpop.f32.mrf.mxu0
      %v1059 = vadd.f32 %v769, %v1058
      %v1060 = vpop.f32.mrf.mxu0
      %1061 = vmatprep.mubr.f32.mxu0 0.0
      %1062 = vmatmul.mubr.f32.gmra.mxu0 %v848
      %v1063 = vpop.f32.mrf.mxu0
      %v1064 = vadd.f32 %v769, %v1063
      %v1065 = vpop.f32.mrf.mxu0
      %1066 = vmatprep.mubr.f32.mxu0 0.0
      %1067 = vmatmul.mubr.f32.gmra.mxu0 %v851
      %v1068 = vpop.f32.mrf.mxu0
      %v1069 = vadd.f32 %v769, %v1068
      %v1070 = vpop.f32.mrf.mxu0
      %1071 = vmatprep.mubr.f32.mxu0 0.0
      %1072 = vmatmul.mubr.f32.gmra.mxu0 %v854
      %v1073 = vpop.f32.mrf.mxu0
      %v1074 = vadd.f32 %v769, %v1073
      %v1075 = vpop.f32.mrf.mxu0
      %1076 = vmatprep.mubr.f32.mxu0 0.0
      %1077 = vmatmul.mubr.f32.gmra.mxu0 %v857
      %v1078 = vpop.f32.mrf.mxu0
      %v1079 = vadd.f32 %v769, %v1078
      %v1080 = vpop.f32.mrf.mxu0
      %1081 = vmatprep.mubr.f32.mxu0 0.0
      %1082 = vmatmul.mubr.f32.gmra.mxu0 %v860
      %v1083 = vpop.f32.mrf.mxu0
      %v1084 = vadd.f32 %v769, %v1083
      %v1085 = vpop.f32.mrf.mxu0
      %1086 = vmatprep.mubr.f32.mxu0 0.0
      %1087 = vmatmul.mubr.f32.gmra.mxu0 %v863
      %v1088 = vpop.f32.mrf.mxu0
      %v1089 = vadd.f32 %v769, %v1088
      %v1090 = vpop.f32.mrf.mxu0
      %1091 = vmatprep.mubr.f32.mxu0 0.0
      %1092 = vmatmul.mubr.f32.gmra.mxu0 %v866
      %v1093 = vpop.f32.mrf.mxu0
      %v1094 = vadd.f32 %v769, %v1093
      %v1095 = vpop.f32.mrf.mxu0
      %1096 = vdwg.mxu0
      %vm1097 = vcmask 31744
      %1098 = vst.msk [vmem:[%s226] sm:$0xff] %vm1097, %v939
      %1099 = vst.msk [vmem:[%s226 + $0x8] sm:$0xff] %vm1097, %v944
      %1100 = vst.msk [vmem:[%s226 + $0x10] sm:$0xff] %vm1097, %v949
      %1101 = vst.msk [vmem:[%s226 + $0x18] sm:$0xff] %vm1097, %v954
      %1102 = vst.msk [vmem:[%s226 + $0x20] sm:$0xff] %vm1097, %v959
      %1103 = vst.msk [vmem:[%s226 + $0x28] sm:$0xff] %vm1097, %v964
      %1104 = vst.msk [vmem:[%s226 + $0x30] sm:$0xff] %vm1097, %v969
      %1105 = vst.msk [vmem:[%s226 + $0x38] sm:$0xff] %vm1097, %v974
      %1106 = vst.msk [vmem:[%s226 + $0x40] sm:$0xff] %vm1097, %v979
      %1107 = vst.msk [vmem:[%s226 + $0x48] sm:$0xff] %vm1097, %v984
      %1108 = vst.msk [vmem:[%s226 + $0x50] sm:$0xff] %vm1097, %v989
      %1109 = vst.msk [vmem:[%s226 + $0x58] sm:$0xff] %vm1097, %v994
      %1110 = vst.msk [vmem:[%s226 + $0x60] sm:$0xff] %vm1097, %v999
      %1111 = vst.msk [vmem:[%s226 + $0x68] sm:$0xff] %vm1097, %v1004
      %1112 = vst.msk [vmem:[%s226 + $0x70] sm:$0xff] %vm1097, %v1009
      %1113 = vst.msk [vmem:[%s226 + $0x78] sm:$0xff] %vm1097, %v1014
      %1114 = vst.msk [vmem:[%s226 + $0x80] sm:$0xff] %vm1097, %v1019
      %1115 = vst.msk [vmem:[%s226 + $0x88] sm:$0xff] %vm1097, %v1024
      %1116 = vst.msk [vmem:[%s226 + $0x90] sm:$0xff] %vm1097, %v1029
      %1117 = vst.msk [vmem:[%s226 + $0x98] sm:$0xff] %vm1097, %v1034
      %1118 = vst.msk [vmem:[%s226 + $0xa0] sm:$0xff] %vm1097, %v1039
      %1119 = vst.msk [vmem:[%s226 + $0xa8] sm:$0xff] %vm1097, %v1044
      %1120 = vst.msk [vmem:[%s226 + $0xb0] sm:$0xff] %vm1097, %v1049
      %1121 = vst.msk [vmem:[%s226 + $0xb8] sm:$0xff] %vm1097, %v1054
      %1122 = vst.msk [vmem:[%s226 + $0xc0] sm:$0xff] %vm1097, %v1059
      %1123 = vst.msk [vmem:[%s226 + $0xc8] sm:$0xff] %vm1097, %v1064
      %1124 = vst.msk [vmem:[%s226 + $0xd0] sm:$0xff] %vm1097, %v1069
      %1125 = vst.msk [vmem:[%s226 + $0xd8] sm:$0xff] %vm1097, %v1074
      %1126 = vst.msk [vmem:[%s226 + $0xe0] sm:$0xff] %vm1097, %v1079
      %1127 = vst.msk [vmem:[%s226 + $0xe8] sm:$0xff] %vm1097, %v1084
      %1128 = vst.msk [vmem:[%s226 + $0xf0] sm:$0xff] %vm1097, %v1089
      %1129 = vst.msk [vmem:[%s226 + $0xf8] sm:$0xff] %vm1097, %v1094
      %s1130 = smul.u32 32, %s16
      %p1131 = scmp.lt.s32.totalorder %s1130, 63
      %s1132 = scalar_select %p1131, %s1130, 63
      %s1133 = smul.addr %s1132, 8
      %s1134 = scalar_lea.vmem %s5, %s1133
      // Predicated region
      $region41: #{tpu_custom_call.1} parent=39 // pred_check
        %p1135 = pneg %p144
      $region42: #{tpu_custom_call.1} parent=39 // pred_check_branch
        %1137 = sbr.rel (%p1135) target = $region44
      $region43: #{tpu_custom_call.1} parent=39 // pred_region
        %s1138 = smul.u32 32, %s16
      $region44: #{tpu_custom_call.1} parent=39 // pred_fallthru
        _
    $region40: #{tpu_custom_call.1} parent=5 // pred_fallthru
      _
    %p1139 = scmp.le.s32.totalorder 2, %s11
    // Predicated region
    $region45: #{tpu_custom_call.1} parent=5 // pred_check
      %p1140 = pneg %p1139
    $region46: #{tpu_custom_call.1} parent=5 // pred_check_branch
      %1142 = sbr.rel (%p1140) target = $region48
    $region47: #{tpu_custom_call.1} parent=5 // pred_region
      %s1143 = ssub.s32 %s11, 2
      // Predicated region
      $region49: #{tpu_custom_call.1} parent=47 // pred_check
        %p1144 = pneg %p150
      $region50: #{tpu_custom_call.1} parent=47 // pred_check_branch
        %1146 = sbr.rel (%p1144) target = $region52
      $region51: #{tpu_custom_call.1} parent=47 // pred_region
        %s1147 = smul.u32 32, %s17
        %p1148 = scmp.lt.s32.totalorder %s1147, 63
        %s1149 = scalar_select %p1148, %s1147, 63
        %s1150 = smul.addr %s1149, 8
        %s1151 = scalar_lea.vmem %s5, %s1150
      $region52: #{tpu_custom_call.1} parent=47 // pred_fallthru
        _
    $region48: #{tpu_custom_call.1} parent=5 // pred_fallthru
      _
  $region6: #{tpu_custom_call.1} parent=0 // loop_footer
    %s15 = sadd.s32 1, %s11
  $region7: #{tpu_custom_call.1} parent=0 // loop_footer_branch
    %10 = sbr.rel target = $region3
  $region8: #{tpu_custom_call.1} parent=0 // loop_exit
    _

</llo_original>
